<compile_context>
chip_gen: v7x
topology: tpu7x:2x2x1
jax: 0.10.0
libtpu: 0.0.40
codegen_flags: <defaults>
</compile_context>

<pallas_src>
import functools

import jax
import jax.numpy as jnp
from jax.experimental import pallas as pl
from jax.experimental.pallas import tpu as pltpu


def _cheb_conv_kernel(x_ref, w_ref, a_ref, o_ref, y_ref, *, K):
    # x_ref: (bb, N, F_in*T)          bf16, pipelined per batch block
    # w_ref: (K, F_in*T, F_out*T_pad) bf16, VMEM-resident fused Theta (delta-in-time)
    # a_ref: (K, N, N)                bf16, VMEM-resident stacked T_k^T
    # o_ref: (bb, N, F_out*T_pad)     f32 output block (lane-dense, padded to 128)
    # y_ref: (bb, N, F_in*T)          bf16 staging scratch for the graph-matmul result
    bb, n, fit = x_ref.shape
    fot_p = o_ref.shape[-1]
    acc = None
    for k in range(K):                                   # K is small -> static unroll
        # Graph (vertex) contraction y_k = T_k^T @ x : one (N,N) MXU matmul per batch.
        for i in range(bb):                              # bb is small -> static unroll
            y_ref[i] = jnp.dot(a_ref[k], x_ref[i],
                               preferred_element_type=jnp.float32).astype(y_ref.dtype)
        # Fused Theta/time contraction, row-batched over the whole batch block.
        ym = y_ref[...].reshape(bb * n, fit)             # free row-major merge (n % 8 == 0)
        z = jnp.dot(ym, w_ref[k], preferred_element_type=jnp.float32)
        acc = z if acc is None else acc + z
    o_ref[...] = jnp.maximum(acc, 0.0).reshape(bb, n, fot_p).astype(o_ref.dtype)


def _round_up(v, m):
    return -(-v // m) * m


def cheb_conv(x, cheb_polynomials, Theta, *, batch_block=None):
    """x: (B, N, F_in, T); cheb_polynomials: list of K (N, N); Theta: list of K (F_in, F_out).

    Returns relu(sum_k T_k^T @ x_t @ Theta_k) with shape (B, N, F_out, T).
    """
    B, N, F_in, T = x.shape
    K = len(cheb_polynomials)
    F_out = Theta[0].shape[1]

    fit = F_in * T
    fot = F_out * T
    fot_p = _round_up(fot, 128)        # lane-dense (unmasked) output stores
    N_p = _round_up(N, 8)              # sublane-aligned vertex dim

    # ---- wrapper-side precompute: free row-major reshapes, zero pads, bf16 operands ----
    x2 = x.reshape(B, N, fit)
    if N_p != N:
        x2 = jnp.pad(x2, ((0, 0), (0, N_p - N), (0, 0)))
    x2 = x2.astype(jnp.bfloat16)

    tcheb_t = jnp.stack([jnp.transpose(Tk) for Tk in cheb_polynomials])   # (K, N, N) = T_k^T
    if N_p != N:
        tcheb_t = jnp.pad(tcheb_t, ((0, 0), (0, N_p - N), (0, N_p - N)))
    tcheb_t = tcheb_t.astype(jnp.bfloat16)

    # W_k[(f, t'), (o, t)] = Theta_k[f, o] * delta(t', t); columns zero-padded to fot_p.
    theta_s = jnp.stack(Theta).astype(jnp.float32)                        # (K, F_in, F_out)
    eye_t = jnp.eye(T, dtype=jnp.float32)
    wk = jnp.einsum('kfo,st->kfsot', theta_s, eye_t).reshape(K, fit, fot)
    if fot_p != fot:
        wk = jnp.pad(wk, ((0, 0), (0, 0), (0, fot_p - fot)))
    wk = wk.astype(jnp.bfloat16)

    # ---- pick batch_block: largest divisor of B keeping >= 2 grid steps under a v7x-safe
    #      VMEM budget (prefer an even step count to load-balance v7x's two TensorCores).
    const_bytes = int(wk.size) * 2 + int(tcheb_t.size) * 2                # single-buffered

    def _vmem_est(bb):
        x_blk = bb * N_p * fit * 2
        o_blk = bb * N_p * fot_p * 4
        y_scr = bb * N_p * fit * 2
        acc_b = bb * N_p * fot_p * 4
        return const_bytes + 2 * (x_blk + o_blk) + y_scr + acc_b          # x/out double-buffered

    if batch_block is None:
        budget = 40 * 2**20                                # v7x has only 64 MiB physical VMEM
        feasible = [d for d in range(1, B + 1)
                    if B % d == 0 and (B // d >= 2 or B == 1) and _vmem_est(d) <= budget]
        if not feasible:
            feasible = [1]
        even = [d for d in feasible if (B // d) % 2 == 0]
        batch_block = max(even) if even else max(feasible)
    assert B % batch_block == 0, "batch_block must divide B"

    vmem_limit = int(min(max(_vmem_est(batch_block) + (8 << 20), 32 << 20), 128 << 20))

    kernel = functools.partial(_cheb_conv_kernel, K=K)

    out2 = pl.pallas_call(
        kernel,
        out_shape=jax.ShapeDtypeStruct((B, N_p, fot_p), jnp.float32),
        grid=(B // batch_block,),
        in_specs=[
            pl.BlockSpec((batch_block, N_p, fit), lambda b: (b, 0, 0)),    # x (pipelined)
            pl.BlockSpec(memory_space=pltpu.MemorySpace.VMEM),             # fused Theta (resident)
            pl.BlockSpec(memory_space=pltpu.MemorySpace.VMEM),             # stacked T_k^T (resident)
        ],
        out_specs=pl.BlockSpec((batch_block, N_p, fot_p), lambda b: (b, 0, 0)),
        scratch_shapes=[pltpu.VMEM((batch_block, N_p, fit), jnp.bfloat16)],
        compiler_params=pltpu.CompilerParams(
            dimension_semantics=("parallel",),
            vmem_limit_bytes=vmem_limit),
    )(x2, wk, tcheb_t)

    return out2[:, :N, :fot].reshape(B, N, F_out, T)


def cheb_conv_reference(x, cheb_polynomials, Theta):
    """Direct JAX transcription of the PyTorch forward (f32 intermediates)."""
    B, N, F_in, T = x.shape
    K = len(cheb_polynomials)
    F_out = Theta[0].shape[1]
    outs = []
    for t in range(T):
        gs = x[:, :, :, t]                                                # (B, N, F_in)
        out_t = jnp.zeros((B, N, F_out), dtype=jnp.float32)
        for k in range(K):
            Tk = cheb_polynomials[k]
            rhs = jnp.swapaxes(jnp.matmul(jnp.swapaxes(gs, 1, 2), Tk), 1, 2)  # (B, N, F_in)
            out_t = out_t + jnp.matmul(rhs, Theta[k])
        outs.append(out_t[..., None])
    return jax.nn.relu(jnp.concatenate(outs, axis=-1))


if __name__ == "__main__":
    # Small shapes consistent with the module: batch=2, vertices=16, in=4, out=8, T=8, K=3.
    B, N, F_in, F_out, T, K = 2, 16, 4, 8, 8, 3

    key = jax.random.PRNGKey(0)
    kx, ka, *kth = jax.random.split(key, 2 + K)

    x = jax.random.normal(kx, (B, N, F_in, T), dtype=jnp.float32)

    # Chebyshev polynomials of a (stand-in) scaled Laplacian: T0=I, T1=L, T_k=2 L T_{k-1} - T_{k-2}.
    a = jax.random.normal(ka, (N, N), dtype=jnp.float32)
    l_tilde = (a + a.T) / (2.0 * N)
    cheb = [jnp.eye(N, dtype=jnp.float32), l_tilde]
    for _ in range(2, K):
        cheb.append(2.0 * l_tilde @ cheb[-1] - cheb[-2])
    cheb = cheb[:K]

    Theta = [0.5 * jax.random.normal(kth[k], (F_in, F_out), dtype=jnp.float32)
             for k in range(K)]

    out = cheb_conv(x, cheb, Theta)
    out = jax.block_until_ready(out)
    assert out.shape == (B, N, F_out, T)

    # The kernel deliberately uses bf16 operands with f32 accumulation (native MXU dtype);
    # compare against the reference fed the same bf16-quantized operands, bf16-level tol.
    q = lambda v: v.astype(jnp.bfloat16).astype(jnp.float32)
    ref = cheb_conv_reference(q(x), [q(c) for c in cheb], [q(th) for th in Theta])
    assert jnp.allclose(out, ref, atol=5e-2, rtol=5e-2), "mismatch vs reference"

    print("KERNEL_OK")
</pallas_src>

<mosaic_0001>
module attributes {stable_mosaic.version = 11 : i64} {
  func.func @_cheb_conv_kernel(%arg0: i32, %arg1: memref<1x16x32xbf16, #tpu.memory_space<vmem>>, %arg2: memref<3x32x128xbf16, #tpu.memory_space<vmem>>, %arg3: memref<3x16x16xbf16, #tpu.memory_space<vmem>>, %arg4: memref<1x16x128xf32, #tpu.memory_space<vmem>>, %arg5: memref<1x16x32xbf16, #tpu.memory_space<vmem>>) attributes {dimension_semantics = [#tpu.dimension_semantics<parallel>], iteration_bounds = array<i64: 2>, scalar_prefetch = 0 : i64, scratch_operands = 1 : i64, tpu.core_type = #tpu.core_type<tc>, window_params = [{transform_indices = @transform_0, window_bounds = array<i64: 1, 16, 32>}, {pipeline_mode = #tpu.pipeline_mode<synchronous>, transform_indices = @transform_1, window_bounds = array<i64: 3, 32, 128>}, {pipeline_mode = #tpu.pipeline_mode<synchronous>, transform_indices = @transform_2, window_bounds = array<i64: 3, 16, 16>}, {transform_indices = @transform_3, window_bounds = array<i64: 1, 16, 128>}]} {
    %c0 = arith.constant 0 : index
    %c0_0 = arith.constant 0 : index
    %c0_1 = arith.constant 0 : index
    %0 = vector.load %arg3[%c0, %c0_0, %c0_1] : memref<3x16x16xbf16, #tpu.memory_space<vmem>>, vector<1x16x16xbf16>
    %1 = vector.shape_cast %0 : vector<1x16x16xbf16> to vector<16x16xbf16>
    %c0_2 = arith.constant 0 : index
    %c0_3 = arith.constant 0 : index
    %c0_4 = arith.constant 0 : index
    %2 = vector.load %arg1[%c0_2, %c0_3, %c0_4] : memref<1x16x32xbf16, #tpu.memory_space<vmem>>, vector<1x16x32xbf16>
    %3 = vector.shape_cast %2 : vector<1x16x32xbf16> to vector<16x32xbf16>
    %cst = arith.constant dense<0.000000e+00> : vector<16x32xf32>
    %4 = tpu.matmul %1, %3, %cst {dimension_numbers = #tpu.dot_dimension_numbers<[1], [0], [0], [1], [0, 0, 1, 1], [], []>} : vector<16x16xbf16>, vector<16x32xbf16>, vector<16x32xf32> -> vector<16x32xf32>
    %5 = arith.truncf %4 : vector<16x32xf32> to vector<16x32xbf16>
    %c0_5 = arith.constant 0 : index
    %c0_6 = arith.constant 0 : index
    %c0_7 = arith.constant 0 : index
    %6 = vector.load %arg5[%c0_5, %c0_6, %c0_7] : memref<1x16x32xbf16, #tpu.memory_space<vmem>>, vector<1x16x32xbf16>
    %7 = vector.shape_cast %6 : vector<1x16x32xbf16> to vector<16x32xbf16>
    %8 = vector.shape_cast %5 : vector<16x32xbf16> to vector<1x16x32xbf16>
    tpu.vector_store %arg5[%c0_5, %c0_6, %c0_7], %8 {strides = array<i32>} : memref<1x16x32xbf16, #tpu.memory_space<vmem>>, vector<1x16x32xbf16>,
    %c0_8 = arith.constant 0 : index
    %c0_9 = arith.constant 0 : index
    %c0_10 = arith.constant 0 : index
    %9 = vector.load %arg5[%c0_8, %c0_9, %c0_10] : memref<1x16x32xbf16, #tpu.memory_space<vmem>>, vector<1x16x32xbf16>
    %10 = vector.shape_cast %9 : vector<1x16x32xbf16> to vector<16x32xbf16>
    %c0_11 = arith.constant 0 : index
    %c0_12 = arith.constant 0 : index
    %c0_13 = arith.constant 0 : index
    %11 = vector.load %arg2[%c0_11, %c0_12, %c0_13] : memref<3x32x128xbf16, #tpu.memory_space<vmem>>, vector<1x32x128xbf16>
    %12 = vector.shape_cast %11 : vector<1x32x128xbf16> to vector<32x128xbf16>
    %cst_14 = arith.constant dense<0.000000e+00> : vector<16x128xf32>
    %13 = tpu.matmul %10, %12, %cst_14 {dimension_numbers = #tpu.dot_dimension_numbers<[1], [0], [0], [1], [0, 0, 1, 1], [], []>} : vector<16x32xbf16>, vector<32x128xbf16>, vector<16x128xf32> -> vector<16x128xf32>
    %c1 = arith.constant 1 : index
    %c0_15 = arith.constant 0 : index
    %c0_16 = arith.constant 0 : index
    %14 = vector.load %arg3[%c1, %c0_15, %c0_16] : memref<3x16x16xbf16, #tpu.memory_space<vmem>>, vector<1x16x16xbf16>
    %15 = vector.shape_cast %14 : vector<1x16x16xbf16> to vector<16x16xbf16>
    %c0_17 = arith.constant 0 : index
    %c0_18 = arith.constant 0 : index
    %c0_19 = arith.constant 0 : index
    %16 = vector.load %arg1[%c0_17, %c0_18, %c0_19] : memref<1x16x32xbf16, #tpu.memory_space<vmem>>, vector<1x16x32xbf16>
    %17 = vector.shape_cast %16 : vector<1x16x32xbf16> to vector<16x32xbf16>
    %cst_20 = arith.constant dense<0.000000e+00> : vector<16x32xf32>
    %18 = tpu.matmul %15, %17, %cst_20 {dimension_numbers = #tpu.dot_dimension_numbers<[1], [0], [0], [1], [0, 0, 1, 1], [], []>} : vector<16x16xbf16>, vector<16x32xbf16>, vector<16x32xf32> -> vector<16x32xf32>
    %19 = arith.truncf %18 : vector<16x32xf32> to vector<16x32xbf16>
    %c0_21 = arith.constant 0 : index
    %c0_22 = arith.constant 0 : index
    %c0_23 = arith.constant 0 : index
    %20 = vector.load %arg5[%c0_21, %c0_22, %c0_23] : memref<1x16x32xbf16, #tpu.memory_space<vmem>>, vector<1x16x32xbf16>
    %21 = vector.shape_cast %20 : vector<1x16x32xbf16> to vector<16x32xbf16>
    %22 = vector.shape_cast %19 : vector<16x32xbf16> to vector<1x16x32xbf16>
    tpu.vector_store %arg5[%c0_21, %c0_22, %c0_23], %22 {strides = array<i32>} : memref<1x16x32xbf16, #tpu.memory_space<vmem>>, vector<1x16x32xbf16>,
    %c0_24 = arith.constant 0 : index
    %c0_25 = arith.constant 0 : index
    %c0_26 = arith.constant 0 : index
    %23 = vector.load %arg5[%c0_24, %c0_25, %c0_26] : memref<1x16x32xbf16, #tpu.memory_space<vmem>>, vector<1x16x32xbf16>
    %24 = vector.shape_cast %23 : vector<1x16x32xbf16> to vector<16x32xbf16>
    %c1_27 = arith.constant 1 : index
    %c0_28 = arith.constant 0 : index
    %c0_29 = arith.constant 0 : index
    %25 = vector.load %arg2[%c1_27, %c0_28, %c0_29] : memref<3x32x128xbf16, #tpu.memory_space<vmem>>, vector<1x32x128xbf16>
    %26 = vector.shape_cast %25 : vector<1x32x128xbf16> to vector<32x128xbf16>
    %cst_30 = arith.constant dense<0.000000e+00> : vector<16x128xf32>
    %27 = tpu.matmul %24, %26, %cst_30 {dimension_numbers = #tpu.dot_dimension_numbers<[1], [0], [0], [1], [0, 0, 1, 1], [], []>} : vector<16x32xbf16>, vector<32x128xbf16>, vector<16x128xf32> -> vector<16x128xf32>
    %28 = arith.addf %13, %27 : vector<16x128xf32>
    %c2 = arith.constant 2 : index
    %c0_31 = arith.constant 0 : index
    %c0_32 = arith.constant 0 : index
    %29 = vector.load %arg3[%c2, %c0_31, %c0_32] : memref<3x16x16xbf16, #tpu.memory_space<vmem>>, vector<1x16x16xbf16>
    %30 = vector.shape_cast %29 : vector<1x16x16xbf16> to vector<16x16xbf16>
    %c0_33 = arith.constant 0 : index
    %c0_34 = arith.constant 0 : index
    %c0_35 = arith.constant 0 : index
    %31 = vector.load %arg1[%c0_33, %c0_34, %c0_35] : memref<1x16x32xbf16, #tpu.memory_space<vmem>>, vector<1x16x32xbf16>
    %32 = vector.shape_cast %31 : vector<1x16x32xbf16> to vector<16x32xbf16>
    %cst_36 = arith.constant dense<0.000000e+00> : vector<16x32xf32>
    %33 = tpu.matmul %30, %32, %cst_36 {dimension_numbers = #tpu.dot_dimension_numbers<[1], [0], [0], [1], [0, 0, 1, 1], [], []>} : vector<16x16xbf16>, vector<16x32xbf16>, vector<16x32xf32> -> vector<16x32xf32>
    %34 = arith.truncf %33 : vector<16x32xf32> to vector<16x32xbf16>
    %c0_37 = arith.constant 0 : index
    %c0_38 = arith.constant 0 : index
    %c0_39 = arith.constant 0 : index
    %35 = vector.load %arg5[%c0_37, %c0_38, %c0_39] : memref<1x16x32xbf16, #tpu.memory_space<vmem>>, vector<1x16x32xbf16>
    %36 = vector.shape_cast %35 : vector<1x16x32xbf16> to vector<16x32xbf16>
    %37 = vector.shape_cast %34 : vector<16x32xbf16> to vector<1x16x32xbf16>
    tpu.vector_store %arg5[%c0_37, %c0_38, %c0_39], %37 {strides = array<i32>} : memref<1x16x32xbf16, #tpu.memory_space<vmem>>, vector<1x16x32xbf16>,
    %c0_40 = arith.constant 0 : index
    %c0_41 = arith.constant 0 : index
    %c0_42 = arith.constant 0 : index
    %38 = vector.load %arg5[%c0_40, %c0_41, %c0_42] : memref<1x16x32xbf16, #tpu.memory_space<vmem>>, vector<1x16x32xbf16>
    %39 = vector.shape_cast %38 : vector<1x16x32xbf16> to vector<16x32xbf16>
    %c2_43 = arith.constant 2 : index
    %c0_44 = arith.constant 0 : index
    %c0_45 = arith.constant 0 : index
    %40 = vector.load %arg2[%c2_43, %c0_44, %c0_45] : memref<3x32x128xbf16, #tpu.memory_space<vmem>>, vector<1x32x128xbf16>
    %41 = vector.shape_cast %40 : vector<1x32x128xbf16> to vector<32x128xbf16>
    %cst_46 = arith.constant dense<0.000000e+00> : vector<16x128xf32>
    %42 = tpu.matmul %39, %41, %cst_46 {dimension_numbers = #tpu.dot_dimension_numbers<[1], [0], [0], [1], [0, 0, 1, 1], [], []>} : vector<16x32xbf16>, vector<32x128xbf16>, vector<16x128xf32> -> vector<16x128xf32>
    %43 = arith.addf %28, %42 : vector<16x128xf32>
    %cst_47 = arith.constant 0.000000e+00 : f32
    %44 = vector.broadcast %cst_47 : f32 to vector<16x128xf32>
    %45 = arith.maximumf %43, %44 : vector<16x128xf32>
    %46 = vector.shape_cast %45 : vector<16x128xf32> to vector<1x16x128xf32>
    %c0_48 = arith.constant 0 : index
    %c0_49 = arith.constant 0 : index
    %c0_50 = arith.constant 0 : index
    %47 = vector.load %arg4[%c0_48, %c0_49, %c0_50] : memref<1x16x128xf32, #tpu.memory_space<vmem>>, vector<1x16x128xf32>
    tpu.vector_store %arg4[%c0_48, %c0_49, %c0_50], %46 {strides = array<i32>} : memref<1x16x128xf32, #tpu.memory_space<vmem>>, vector<1x16x128xf32>,
    return
  }
  func.func @transform_0(%arg0: i32) -> (i32, i32, i32) {
    %c0_i32 = arith.constant 0 : i32
    %c0_i32_0 = arith.constant 0 : i32
    %c0_i32_1 = arith.constant 0 : i32
    return %arg0, %c0_i32, %c0_i32_0 : i32, i32, i32
  }
  func.func @transform_1(%arg0: i32) -> (i32, i32, i32) {
    %c0_i32 = arith.constant 0 : i32
    %c0_i32_0 = arith.constant 0 : i32
    %c0_i32_1 = arith.constant 0 : i32
    %c0_i32_2 = arith.constant 0 : i32
    return %c0_i32, %c0_i32_0, %c0_i32_1 : i32, i32, i32
  }
  func.func @transform_2(%arg0: i32) -> (i32, i32, i32) {
    %c0_i32 = arith.constant 0 : i32
    %c0_i32_0 = arith.constant 0 : i32
    %c0_i32_1 = arith.constant 0 : i32
    %c0_i32_2 = arith.constant 0 : i32
    return %c0_i32, %c0_i32_0, %c0_i32_1 : i32, i32, i32
  }
  func.func @transform_3(%arg0: i32) -> (i32, i32, i32) {
    %c0_i32 = arith.constant 0 : i32
    %c0_i32_0 = arith.constant 0 : i32
    %c0_i32_1 = arith.constant 0 : i32
    return %arg0, %c0_i32, %c0_i32_0 : i32, i32, i32
  }
}

</mosaic_0001>

<llo_original>
// kernel: tpu_custom_call.1
$region0: #{tpu_custom_call.1}
  #allocation0 [shape = 'u32[]', space=smem, size = 0x4, offset = 0x4, fixed_abs, tag = 'smem constant byte address 0x4 - core index']
  #allocation1 [shape = 'u32[144,128]{1,0:T(1,128)}', space=vmem, size = 0x12000, scoped, tag = 'internal scratch']
  #allocation2 [shape = 'bf16[1,16,32]{2,1,0:T(16,128)(2,1)}', space=vmem, size = 0x1000, scoped, tag = 'scratch operand']
  %s0 = inlined_call_operand.hbm [shape: bf16[2,16,32], index: 0, kind: input, shape index: {}]
  %s1 = inlined_call_operand.hbm [shape: bf16[3,32,128], index: 1, kind: input, shape index: {}]
  %s2 = inlined_call_operand.hbm [shape: bf16[3,16,16], index: 2, kind: input, shape index: {}]
  %s3 = inlined_call_operand.hbm [shape: f32[2,16,128], index: 3, kind: output, shape index: {}]
  %s4 = sld [smem:[#allocation0]]
  $region57: #{tpu_custom_call.1} parent=0
    _
  %s6 = ssub.s32 1, %s4
  %s7 = scalar_select 0, %s6, %s4
  $region1: #{tpu_custom_call.1} parent=0
    #allocation3 [shape = 'u8[8192]{0}', space=vmem, size = 0x2000, scoped, tag = 'input window, operand 0']
    #allocation4 [shape = 's32[2]{0}', space=sflag, size = 0x8, scoped, tag = 'scoped memory for tpu_custom_call.1']
    #allocation5 [shape = 's32[2]{0}', space=sflag, size = 0x8, scoped, tag = 'scoped memory for tpu_custom_call.1']
    #allocation6 [shape = 'u8[24576]{0}', space=vmem, size = 0x6000, scoped, tag = 'input window, operand 1, single buffered']
    #allocation7 [shape = 's32[1]{0}', space=sflag, size = 0x4, scoped, tag = 'scoped memory for tpu_custom_call.1']
    #allocation8 [shape = 'u8[12288]{0}', space=vmem, size = 0x3000, scoped, tag = 'input window, operand 2, single buffered']
    #allocation9 [shape = 'u8[16384]{0}', space=vmem, size = 0x4000, scoped, tag = 'output window, operand 0']
    %8 = vsyncpa [#allocation4], 0
    %s9 = scalar_lea.sflag [#allocation4], 1
    %10 = vsyncpa %s9, 0
    %11 = vsyncpa [#allocation7], 0
    %12 = vsyncpa [#allocation5], 0
    %s13 = scalar_lea.sflag [#allocation5], 1
    %14 = vsyncpa %s13, 0
    loop: start=0, step=1, limit=4
    $region2: #{tpu_custom_call.1} parent=1 // loop_pre_header
      _
    $region3: #{tpu_custom_call.1} parent=1 // loop_header
      %s16 = sphi 0, %s20
      %p17 = scmp.ge.s32.totalorder %s16, 4
      %s26 = sphi 0, %s28
      %s29 = sphi 0, %s26
      %s30 = sphi 0, %s29
      %s46 = sphi 0, %s30
      %s50 = sphi 0, %s50
      %s52 = sphi 0, %s50
      %s53 = sphi 0, %s52
      %s67 = sphi 0, %s53
      %s71 = sphi 0, %s71
      %s73 = sphi 0, %s71
      %s74 = sphi 0, %s73
      %s88 = sphi 0, %s74
      %s94 = sphi 0, %s96
      %s97 = sphi 0, %s94
      %s98 = sphi 0, %s97
      %s114 = sphi 0, %s98
    $region4: #{tpu_custom_call.1} parent=1 // loop_header_branch
      %19 = sbr.rel (%p17) target = $region8
    $region5: #{tpu_custom_call.1} parent=1 // loop_body
      %s21 = ssub.s32 %s16, 1
      %s22 = ssub.s32 %s16, 2
      %s23 = sadd.s32 %s16, 1
      %s24 = ssub.s32 %s16, %s23
      %p25 = scmp.eq.s32.totalorder %s24, 0
      %s27 = sadd.s32 %s26, 1
      %s28 = scalar_select %p25, %s26, %s27
      %p31 = pneg %p25
      %p32 = scmp.eq.s32.totalorder %s16, 1
      %p33 = por %p31, %p32
      %p34 = scmp.ne.s32.totalorder %s26, %s29
      %p35 = scmp.eq.s32.totalorder %s16, 0
      %p36 = por %p34, %p35
      %p37 = scmp.ne.s32.totalorder %s26, %s29
      %p38 = scmp.eq.s32.totalorder %s21, 1
      %p39 = por %p37, %p38
      %p40 = scmp.ne.s32.totalorder %s29, %s30
      %p41 = scmp.eq.s32.totalorder %s21, 0
      %p42 = por %p40, %p41
      %p43 = scmp.ne.s32.totalorder %s29, %s30
      %p44 = scmp.eq.s32.totalorder %s22, 1
      %p45 = por %p43, %p44
      %p47 = scmp.ne.s32.totalorder %s30, %s46
      %p48 = scmp.eq.s32.totalorder %s22, 0
      %p49 = por %p47, %p48
      %s51 = sadd.s32 %s50, 1
      %p54 = scmp.eq.s32.totalorder %s16, 1
      %p55 = scmp.ne.s32.totalorder %s50, %s52
      %p56 = scmp.eq.s32.totalorder %s16, 0
      %p57 = por %p55, %p56
      %p58 = scmp.ne.s32.totalorder %s50, %s52
      %p59 = scmp.eq.s32.totalorder %s21, 1
      %p60 = por %p58, %p59
      %p61 = scmp.ne.s32.totalorder %s52, %s53
      %p62 = scmp.eq.s32.totalorder %s21, 0
      %p63 = por %p61, %p62
      %p64 = scmp.ne.s32.totalorder %s52, %s53
      %p65 = scmp.eq.s32.totalorder %s22, 1
      %p66 = por %p64, %p65
      %p68 = scmp.ne.s32.totalorder %s53, %s67
      %p69 = scmp.eq.s32.totalorder %s22, 0
      %p70 = por %p68, %p69
      %s72 = sadd.s32 %s71, 1
      %p75 = scmp.eq.s32.totalorder %s16, 1
      %p76 = scmp.ne.s32.totalorder %s71, %s73
      %p77 = scmp.eq.s32.totalorder %s16, 0
      %p78 = por %p76, %p77
      %p79 = scmp.ne.s32.totalorder %s71, %s73
      %p80 = scmp.eq.s32.totalorder %s21, 1
      %p81 = por %p79, %p80
      %p82 = scmp.ne.s32.totalorder %s73, %s74
      %p83 = scmp.eq.s32.totalorder %s21, 0
      %p84 = por %p82, %p83
      %p85 = scmp.ne.s32.totalorder %s73, %s74
      %p86 = scmp.eq.s32.totalorder %s22, 1
      %p87 = por %p85, %p86
      %p89 = scmp.ne.s32.totalorder %s74, %s88
      %p90 = scmp.eq.s32.totalorder %s22, 0
      %p91 = por %p89, %p90
      %s92 = ssub.s32 %s16, %s23
      %p93 = scmp.eq.s32.totalorder %s92, 0
      %s95 = sadd.s32 %s94, 1
      %s96 = scalar_select %p93, %s94, %s95
      %p99 = pneg %p93
      %p100 = scmp.eq.s32.totalorder %s16, 1
      %p101 = por %p99, %p100
      %p102 = scmp.ne.s32.totalorder %s94, %s97
      %p103 = scmp.eq.s32.totalorder %s16, 0
      %p104 = por %p102, %p103
      %p105 = scmp.ne.s32.totalorder %s94, %s97
      %p106 = scmp.eq.s32.totalorder %s21, 1
      %p107 = por %p105, %p106
      %p108 = scmp.ne.s32.totalorder %s97, %s98
      %p109 = scmp.eq.s32.totalorder %s21, 0
      %p110 = por %p108, %p109
      %p111 = scmp.ne.s32.totalorder %s97, %s98
      %p112 = scmp.eq.s32.totalorder %s22, 1
      %p113 = por %p111, %p112
      %p115 = scmp.ne.s32.totalorder %s98, %s114
      %p116 = scmp.eq.s32.totalorder %s22, 0
      %p117 = por %p115, %p116
      %p118 = scmp.le.s32.totalorder 1, %s16
      %p119 = scmp.lt.s32.totalorder %s16, 3
      %p120 = pnand %p118, %p119
      %p121 = pneg %p120
      // Predicated region
      $region9: #{tpu_custom_call.1} parent=5 // pred_check
        _
      $region10: #{tpu_custom_call.1} parent=5 // pred_check_branch
        %123 = sbr.rel (%p120) target = $region12
      $region11: #{tpu_custom_call.1} parent=5 // pred_region
        %s124 = ssub.s32 %s16, 1
        // Predicated region
        $region13: #{tpu_custom_call.1} parent=11 // pred_check
          %p125 = pneg %p63
        $region14: #{tpu_custom_call.1} parent=11 // pred_check_branch
          %127 = sbr.rel (%p125) target = $region16
        $region15: #{tpu_custom_call.1} parent=11 // pred_region
          %s129 = ssub.s32 768, 768
          %130 = vsyncadd [#allocation7], %s129
          %s131 = sshll.u32 [#allocation6], 4
          %s132 = int_to_ptr.vmem [resolvable:$true] %s131
          %137 = dma.hbm_to_vmem [thread:$0]  %s1, 768, %s132, [#allocation7], 64, 64, 4
        $region16: #{tpu_custom_call.1} parent=11 // pred_fallthru
          _
        // Predicated region
        $region17: #{tpu_custom_call.1} parent=11 // pred_check
          %p138 = pneg %p84
        $region18: #{tpu_custom_call.1} parent=11 // pred_check_branch
          %140 = sbr.rel (%p138) target = $region20
        $region19: #{tpu_custom_call.1} parent=11 // pred_region
          %s142 = ssub.s32 384, 384
          %143 = vsyncadd [#allocation7], %s142
          %s144 = sshll.u32 [#allocation8], 4
          %s145 = int_to_ptr.vmem [resolvable:$true] %s144
          %150 = dma.hbm_to_vmem [thread:$0]  %s2, 384, %s145, [#allocation7], 64, 64, 4
        $region20: #{tpu_custom_call.1} parent=11 // pred_fallthru
          _
      $region12: #{tpu_custom_call.1} parent=5 // pred_fallthru
        _
      %p151 = scmp.lt.s32.totalorder %s16, 2
      // Predicated region
      $region21: #{tpu_custom_call.1} parent=5 // pred_check
        %p152 = pneg %p151
      $region22: #{tpu_custom_call.1} parent=5 // pred_check_branch
        %154 = sbr.rel (%p152) target = $region24
      $region23: #{tpu_custom_call.1} parent=5 // pred_region
        // Predicated region
        $region25: #{tpu_custom_call.1} parent=23 // pred_check
          %p155 = pneg %p36
        $region26: #{tpu_custom_call.1} parent=23 // pred_check_branch
          %157 = sbr.rel (%p155) target = $region28
        $region27: #{tpu_custom_call.1} parent=23 // pred_region
          %s158 = sand.u32 %s26, 1
          %s159 = scalar_lea.sflag [#allocation4], %s158
          %s160 = sand.u32 %s26, 1
          %s161 = smul.addr %s160, 8
          %s162 = scalar_lea.vmem [#allocation3], %s161
          %s164 = ssub.s32 128, 128
          %165 = vsyncadd %s159, %s164
          %s166 = smul.addr %s16, 2
          %s167 = smul.addr %s166, 64
          %s168 = scalar_lea.hbm %s0, %s167
          %s169 = sshll.u32 %s162, 4
          %s170 = int_to_ptr.vmem [resolvable:$true] %s169
          %175 = dma.hbm_to_vmem [thread:$0]  %s168, 128, %s170, %s159, 64, 64, 4
        $region28: #{tpu_custom_call.1} parent=23 // pred_fallthru
          _
      $region24: #{tpu_custom_call.1} parent=5 // pred_fallthru
        _
      %p176 = scmp.le.s32.totalorder 1, %s16
      %p177 = scmp.lt.s32.totalorder %s16, 3
      %p178 = pnand %p176, %p177
      %p179 = pneg %p178
      // Predicated region
      $region29: #{tpu_custom_call.1} parent=5 // pred_check
        _
      $region30: #{tpu_custom_call.1} parent=5 // pred_check_branch
        %181 = sbr.rel (%p178) target = $region32
      $region31: #{tpu_custom_call.1} parent=5 // pred_region
        %s182 = ssub.s32 %s16, 1
        %s183 = sand.u32 %s29, 1
        %s184 = scalar_lea.sflag [#allocation4], %s183
        %s185 = sand.u32 %s29, 1
        %s186 = smul.addr %s185, 8
        %s187 = scalar_lea.vmem [#allocation3], %s186
        // Predicated region
        $region33: #{tpu_custom_call.1} parent=31 // pred_check
          %p188 = pneg %p42
        $region34: #{tpu_custom_call.1} parent=31 // pred_check_branch
          %190 = sbr.rel (%p188) target = $region36
        $region35: #{tpu_custom_call.1} parent=31 // pred_region
          %191 = dma.done %s184, 128
        $region36: #{tpu_custom_call.1} parent=31 // pred_fallthru
          _
        // Predicated region
        $region37: #{tpu_custom_call.1} parent=31 // pred_check
          %p192 = pneg %p63
        $region38: #{tpu_custom_call.1} parent=31 // pred_check_branch
          %194 = sbr.rel (%p192) target = $region40
        $region39: #{tpu_custom_call.1} parent=31 // pred_region
          %195 = dma.done [#allocation7], 768
        $region40: #{tpu_custom_call.1} parent=31 // pred_fallthru
          _
        // Predicated region
        $region41: #{tpu_custom_call.1} parent=31 // pred_check
          %p196 = pneg %p84
        $region42: #{tpu_custom_call.1} parent=31 // pred_check_branch
          %198 = sbr.rel (%p196) target = $region44
        $region43: #{tpu_custom_call.1} parent=31 // pred_region
          %199 = dma.done [#allocation7], 384
        $region44: #{tpu_custom_call.1} parent=31 // pred_fallthru
          _
        %s200 = sand.u32 %s29, 1
        %s201 = scalar_lea.sflag [#allocation4], %s200
        %s202 = sand.u32 %s29, 1
        %s203 = smul.addr %s202, 8
        %s204 = scalar_lea.vmem [#allocation3], %s203
        %p205 = pneg %p42
        %p206 = pneg %p39
        %p207 = pneg %p63
        %p208 = pneg %p60
        %p209 = pneg %p84
        %p210 = pneg %p81
        %p211 = pneg %p110
        %p212 = pneg %p107
        %s213 = sand.u32 %s97, 1
        %s214 = scalar_lea.sflag [#allocation5], %s213
        %s215 = sand.u32 %s97, 1
        %s216 = smul.addr %s215, 16
        %s217 = scalar_lea.vmem [#allocation9], %s216
        %v219 = vld [vmem:[#allocation8] sm:$0xf]
        %v220 = vld [vmem:[#allocation8 + $0x4] sm:$0xf]
        %v221 = vld [vmem:[%s187] sm:$0xf]
        %v222 = vld [vmem:[%s187 + $0x4] sm:$0xf]
        %v225 = vunpack.c.l.b16 %v219
        %v226 = vunpack.c.l.b16 %v220
        %v227 = vpack.c.b16 %v226, %v225
        %v230 = vunpack.c.l.b16 %v221
        %v231 = vunpack.c.l.b16 %v222
        %v232 = vpack.c.b16 %v231, %v230
        %vm234 = vcmask 130048
        %v236 = vsel %vm234, %v227, 0
        %238 = vmatprep.subr.bf16.mxu0 0
        %239 = vmatpush1.bf16.msra.mxu0 %v232
        %240 = vmatprep.subr.bf16.mxu0 0
        %241 = vmatpush1.bf16.msra.mxu0 0
        %242 = vmatprep.subr.bf16.mxu0 0
        %243 = vmatpush1.bf16.msra.mxu0 0
        %244 = vmatprep.subr.bf16.mxu0 0
        %245 = vmatpush1.bf16.msra.mxu0 0
        %246 = vmatprep.subr.bf16.mxu0 0
        %247 = vmatpush1.bf16.msra.mxu0 0
        %248 = vmatprep.subr.bf16.mxu0 0
        %249 = vmatpush1.bf16.msra.mxu0 0
        %250 = vmatprep.subr.bf16.mxu0 0
        %251 = vmatpush1.bf16.msra.mxu0 0
        %252 = vmatprep.subr.bf16.mxu0 0
        %253 = vmatpush1.bf16.msra.mxu0 0
        %254 = vmatprep.subr.bf16.mxu0 0
        %255 = vmatpush1.bf16.msra.mxu0 0
        %256 = vmatprep.subr.bf16.mxu0 0
        %257 = vmatpush1.bf16.msra.mxu0 0
        %258 = vmatprep.subr.bf16.mxu0 0
        %259 = vmatpush1.bf16.msra.mxu0 0
        %260 = vmatprep.subr.bf16.mxu0 0
        %261 = vmatpush1.bf16.msra.mxu0 0
        %262 = vmatprep.subr.bf16.mxu0 0
        %263 = vmatpush1.bf16.msra.mxu0 0
        %264 = vmatprep.subr.bf16.mxu0 0
        %265 = vmatpush1.bf16.msra.mxu0 0
        %266 = vmatprep.subr.bf16.mxu0 0
        %267 = vmatpush1.bf16.msra.mxu0 0
        %268 = vmatprep.subr.bf16.mxu0 0
        %269 = vmatpush1.bf16.msra.mxu0 0
        %270 = vmatprep.mubr.bf16.mxu0 0
        %271 = vmatmul.mubr.bf16.gmra.mrb[0].mxu0 %v236
        %v272 = vpop.f32.mrb[0].mxu0
        %v273 = vadd.f32 0.0, %v272
        %v274 = vpop.f32.mrb[0].mxu0
        %v275 = vpop.f32.mrb[0].mxu0
        %v276 = vadd.f32 0.0, %v275
        %v277 = vpop.f32.mrb[0].mxu0
        %278 = vdwg.mxu0
        %v279 = vpack.c.bf16 %v276, %v273
        %vm280 = vcmask 261120
        %281 = vst.msk [vmem:[#allocation2] sm:$0xff] %vm280, %v279
        %v282 = vld [vmem:[#allocation2] sm:$0xff]
        %v283 = vld [vmem:[#allocation6] sm:$0xf]
        %v284 = vld [vmem:[#allocation6 + $0x4] sm:$0xf]
        %v285 = vld [vmem:[#allocation6 + $0x8] sm:$0xf]
        %v286 = vld [vmem:[#allocation6 + $0xc] sm:$0xf]
        %s287 = scalar_lea.vmem [#allocation8], 8
        %v288 = vld [vmem:[%s287] sm:$0xf]
        %v289 = vld [vmem:[%s287 + $0x4] sm:$0xf]
        %v290 = vld [vmem:[%s187] sm:$0xf]
        %v291 = vld [vmem:[%s187 + $0x4] sm:$0xf]
        %v294 = vunpack.c.l.b16 %v288
        %v295 = vunpack.c.l.b16 %v289
        %v296 = vpack.c.b16 %v295, %v294
        %v299 = vunpack.c.l.b16 %v290
        %v300 = vunpack.c.l.b16 %v291
        %v301 = vpack.c.b16 %v300, %v299
        %v304 = vsel %vm234, %v296, 0
        %306 = vmatprep.subr.bf16.mxu0 0
        %307 = vmatpush1.bf16.msra.mxu0 %v301
        %308 = vmatprep.subr.bf16.mxu0 0
        %309 = vmatpush1.bf16.msra.mxu0 0
        %310 = vmatprep.subr.bf16.mxu0 0
        %311 = vmatpush1.bf16.msra.mxu0 0
        %312 = vmatprep.subr.bf16.mxu0 0
        %313 = vmatpush1.bf16.msra.mxu0 0
        %314 = vmatprep.subr.bf16.mxu0 0
        %315 = vmatpush1.bf16.msra.mxu0 0
        %316 = vmatprep.subr.bf16.mxu0 0
        %317 = vmatpush1.bf16.msra.mxu0 0
        %318 = vmatprep.subr.bf16.mxu0 0
        %319 = vmatpush1.bf16.msra.mxu0 0
        %320 = vmatprep.subr.bf16.mxu0 0
        %321 = vmatpush1.bf16.msra.mxu0 0
        %322 = vmatprep.subr.bf16.mxu0 0
        %323 = vmatpush1.bf16.msra.mxu0 0
        %324 = vmatprep.subr.bf16.mxu0 0
        %325 = vmatpush1.bf16.msra.mxu0 0
        %326 = vmatprep.subr.bf16.mxu0 0
        %327 = vmatpush1.bf16.msra.mxu0 0
        %328 = vmatprep.subr.bf16.mxu0 0
        %329 = vmatpush1.bf16.msra.mxu0 0
        %330 = vmatprep.subr.bf16.mxu0 0
        %331 = vmatpush1.bf16.msra.mxu0 0
        %332 = vmatprep.subr.bf16.mxu0 0
        %333 = vmatpush1.bf16.msra.mxu0 0
        %334 = vmatprep.subr.bf16.mxu0 0
        %335 = vmatpush1.bf16.msra.mxu0 0
        %336 = vmatprep.subr.bf16.mxu0 0
        %337 = vmatpush1.bf16.msra.mxu0 0
        %338 = vmatprep.mubr.bf16.mxu0 0
        %339 = vmatmul.mubr.bf16.gmra.mrb[0].mxu0 %v304
        %v340 = vpop.f32.mrb[0].mxu0
        %v341 = vadd.f32 0.0, %v340
        %v342 = vpop.f32.mrb[0].mxu0
        %v343 = vpop.f32.mrb[0].mxu0
        %v344 = vadd.f32 0.0, %v343
        %v345 = vpop.f32.mrb[0].mxu0
        %346 = vdwg.mxu0
        %v347 = vpack.c.bf16 %v344, %v341
        %348 = vst.msk [vmem:[#allocation2] sm:$0xff] %vm280, %v347
        %v349 = vld [vmem:[#allocation2] sm:$0xff]
        %s350 = scalar_lea.vmem [#allocation6], 16
        %v351 = vld [vmem:[%s350] sm:$0xf]
        %v352 = vld [vmem:[%s350 + $0x4] sm:$0xf]
        %v353 = vld [vmem:[%s350 + $0x8] sm:$0xf]
        %v354 = vld [vmem:[%s350 + $0xc] sm:$0xf]
        %v359 = vunpack.c.l.b16 %v351
        %v360 = vunpack.c.l.b16 %v352
        %v361 = vunpack.c.l.b16 %v353
        %v362 = vunpack.c.l.b16 %v354
        %v363 = vpack.c.b16 %v360, %v359
        %v364 = vpack.c.b16 %v362, %v361
        %v368 = vsel %vm280, %v349, 0
        %370 = vmatprep.subr.bf16.mxu0 0
        %371 = vmatpush1.bf16.msra.mxu0 %v363
        %372 = vmatprep.subr.bf16.mxu0 0
        %373 = vmatpush1.bf16.msra.mxu0 %v364
        %374 = vmatprep.subr.bf16.mxu0 0
        %375 = vmatpush1.bf16.msra.mxu0 0
        %376 = vmatprep.subr.bf16.mxu0 0
        %377 = vmatpush1.bf16.msra.mxu0 0
        %378 = vmatprep.subr.bf16.mxu0 0
        %379 = vmatpush1.bf16.msra.mxu0 0
        %380 = vmatprep.subr.bf16.mxu0 0
        %381 = vmatpush1.bf16.msra.mxu0 0
        %382 = vmatprep.subr.bf16.mxu0 0
        %383 = vmatpush1.bf16.msra.mxu0 0
        %384 = vmatprep.subr.bf16.mxu0 0
        %385 = vmatpush1.bf16.msra.mxu0 0
        %386 = vmatprep.subr.bf16.mxu0 0
        %387 = vmatpush1.bf16.msra.mxu0 0
        %388 = vmatprep.subr.bf16.mxu0 0
        %389 = vmatpush1.bf16.msra.mxu0 0
        %390 = vmatprep.subr.bf16.mxu0 0
        %391 = vmatpush1.bf16.msra.mxu0 0
        %392 = vmatprep.subr.bf16.mxu0 0
        %393 = vmatpush1.bf16.msra.mxu0 0
        %394 = vmatprep.subr.bf16.mxu0 0
        %395 = vmatpush1.bf16.msra.mxu0 0
        %396 = vmatprep.subr.bf16.mxu0 0
        %397 = vmatpush1.bf16.msra.mxu0 0
        %398 = vmatprep.subr.bf16.mxu0 0
        %399 = vmatpush1.bf16.msra.mxu0 0
        %400 = vmatprep.subr.bf16.mxu0 0
        %401 = vmatpush1.bf16.msra.mxu0 0
        %402 = vmatprep.mubr.bf16.mxu0 0
        %403 = vmatmul.mubr.bf16.gmra.mrb[0].mxu0 %v368
        %v404 = vpop.f32.mrb[0].mxu0
        %v405 = vadd.f32 0.0, %v404
        %v406 = vpop.f32.mrb[0].mxu0
        %v407 = vpop.f32.mrb[0].mxu0
        %v408 = vadd.f32 0.0, %v407
        %v409 = vpop.f32.mrb[0].mxu0
        %410 = vdwg.mxu0
        %v415 = vunpack.c.l.b16 %v283
        %v416 = vunpack.c.l.b16 %v284
        %v417 = vunpack.c.l.b16 %v285
        %v418 = vunpack.c.l.b16 %v286
        %v419 = vpack.c.b16 %v416, %v415
        %v420 = vpack.c.b16 %v418, %v417
        %v424 = vsel %vm280, %v282, 0
        %426 = vmatprep.subr.bf16.mxu0 0
        %427 = vmatpush1.bf16.msra.mxu0 %v419
        %428 = vmatprep.subr.bf16.mxu0 0
        %429 = vmatpush1.bf16.msra.mxu0 %v420
        %430 = vmatprep.subr.bf16.mxu0 0
        %431 = vmatpush1.bf16.msra.mxu0 0
        %432 = vmatprep.subr.bf16.mxu0 0
        %433 = vmatpush1.bf16.msra.mxu0 0
        %434 = vmatprep.subr.bf16.mxu0 0
        %435 = vmatpush1.bf16.msra.mxu0 0
        %436 = vmatprep.subr.bf16.mxu0 0
        %437 = vmatpush1.bf16.msra.mxu0 0
        %438 = vmatprep.subr.bf16.mxu0 0
        %439 = vmatpush1.bf16.msra.mxu0 0
        %440 = vmatprep.subr.bf16.mxu0 0
        %441 = vmatpush1.bf16.msra.mxu0 0
        %442 = vmatprep.subr.bf16.mxu0 0
        %443 = vmatpush1.bf16.msra.mxu0 0
        %444 = vmatprep.subr.bf16.mxu0 0
        %445 = vmatpush1.bf16.msra.mxu0 0
        %446 = vmatprep.subr.bf16.mxu0 0
        %447 = vmatpush1.bf16.msra.mxu0 0
        %448 = vmatprep.subr.bf16.mxu0 0
        %449 = vmatpush1.bf16.msra.mxu0 0
        %450 = vmatprep.subr.bf16.mxu0 0
        %451 = vmatpush1.bf16.msra.mxu0 0
        %452 = vmatprep.subr.bf16.mxu0 0
        %453 = vmatpush1.bf16.msra.mxu0 0
        %454 = vmatprep.subr.bf16.mxu0 0
        %455 = vmatpush1.bf16.msra.mxu0 0
        %456 = vmatprep.subr.bf16.mxu0 0
        %457 = vmatpush1.bf16.msra.mxu0 0
        %458 = vmatprep.mubr.bf16.mxu0 0
        %459 = vmatmul.mubr.bf16.gmra.mrb[0].mxu0 %v424
        %v460 = vpop.f32.mrb[0].mxu0
        %v461 = vadd.f32 %v405, %v460
        %v462 = vpop.f32.mrb[0].mxu0
        %v463 = vpop.f32.mrb[0].mxu0
        %v464 = vadd.f32 %v408, %v463
        %v465 = vpop.f32.mrb[0].mxu0
        %466 = vdwg.mxu0
        %s467 = scalar_lea.vmem [#allocation8], 16
        %v468 = vld [vmem:[%s467] sm:$0xf]
        %v469 = vld [vmem:[%s467 + $0x4] sm:$0xf]
        %v470 = vld [vmem:[%s187] sm:$0xf]
        %v471 = vld [vmem:[%s187 + $0x4] sm:$0xf]
        %v474 = vunpack.c.l.b16 %v468
        %v475 = vunpack.c.l.b16 %v469
        %v476 = vpack.c.b16 %v475, %v474
        %v479 = vunpack.c.l.b16 %v470
        %v480 = vunpack.c.l.b16 %v471
        %v481 = vpack.c.b16 %v480, %v479
        %v484 = vsel %vm234, %v476, 0
        %486 = vmatprep.subr.bf16.mxu0 0
        %487 = vmatpush1.bf16.msra.mxu0 %v481
        %488 = vmatprep.subr.bf16.mxu0 0
        %489 = vmatpush1.bf16.msra.mxu0 0
        %490 = vmatprep.subr.bf16.mxu0 0
        %491 = vmatpush1.bf16.msra.mxu0 0
        %492 = vmatprep.subr.bf16.mxu0 0
        %493 = vmatpush1.bf16.msra.mxu0 0
        %494 = vmatprep.subr.bf16.mxu0 0
        %495 = vmatpush1.bf16.msra.mxu0 0
        %496 = vmatprep.subr.bf16.mxu0 0
        %497 = vmatpush1.bf16.msra.mxu0 0
        %498 = vmatprep.subr.bf16.mxu0 0
        %499 = vmatpush1.bf16.msra.mxu0 0
        %500 = vmatprep.subr.bf16.mxu0 0
        %501 = vmatpush1.bf16.msra.mxu0 0
        %502 = vmatprep.subr.bf16.mxu0 0
        %503 = vmatpush1.bf16.msra.mxu0 0
        %504 = vmatprep.subr.bf16.mxu0 0
        %505 = vmatpush1.bf16.msra.mxu0 0
        %506 = vmatprep.subr.bf16.mxu0 0
        %507 = vmatpush1.bf16.msra.mxu0 0
        %508 = vmatprep.subr.bf16.mxu0 0
        %509 = vmatpush1.bf16.msra.mxu0 0
        %510 = vmatprep.subr.bf16.mxu0 0
        %511 = vmatpush1.bf16.msra.mxu0 0
        %512 = vmatprep.subr.bf16.mxu0 0
        %513 = vmatpush1.bf16.msra.mxu0 0
        %514 = vmatprep.subr.bf16.mxu0 0
        %515 = vmatpush1.bf16.msra.mxu0 0
        %516 = vmatprep.subr.bf16.mxu0 0
        %517 = vmatpush1.bf16.msra.mxu0 0
        %518 = vmatprep.mubr.bf16.mxu0 0
        %519 = vmatmul.mubr.bf16.gmra.mrb[0].mxu0 %v484
        %v520 = vpop.f32.mrb[0].mxu0
        %v521 = vadd.f32 0.0, %v520
        %v522 = vpop.f32.mrb[0].mxu0
        %v523 = vpop.f32.mrb[0].mxu0
        %v524 = vadd.f32 0.0, %v523
        %v525 = vpop.f32.mrb[0].mxu0
        %526 = vdwg.mxu0
        %v527 = vpack.c.bf16 %v524, %v521
        %528 = vst.msk [vmem:[#allocation2] sm:$0xff] %vm280, %v527
        %v529 = vld [vmem:[#allocation2] sm:$0xff]
        %s530 = scalar_lea.vmem [#allocation6], 32
        %v531 = vld [vmem:[%s530] sm:$0xf]
        %v532 = vld [vmem:[%s530 + $0x4] sm:$0xf]
        %v533 = vld [vmem:[%s530 + $0x8] sm:$0xf]
        %v534 = vld [vmem:[%s530 + $0xc] sm:$0xf]
        %v539 = vunpack.c.l.b16 %v531
        %v540 = vunpack.c.l.b16 %v532
        %v541 = vunpack.c.l.b16 %v533
        %v542 = vunpack.c.l.b16 %v534
        %v543 = vpack.c.b16 %v540, %v539
        %v544 = vpack.c.b16 %v542, %v541
        %v548 = vsel %vm280, %v529, 0
        %550 = vmatprep.subr.bf16.mxu0 0
        %551 = vmatpush1.bf16.msra.mxu0 %v543
        %552 = vmatprep.subr.bf16.mxu0 0
        %553 = vmatpush1.bf16.msra.mxu0 %v544
        %554 = vmatprep.subr.bf16.mxu0 0
        %555 = vmatpush1.bf16.msra.mxu0 0
        %556 = vmatprep.subr.bf16.mxu0 0
        %557 = vmatpush1.bf16.msra.mxu0 0
        %558 = vmatprep.subr.bf16.mxu0 0
        %559 = vmatpush1.bf16.msra.mxu0 0
        %560 = vmatprep.subr.bf16.mxu0 0
        %561 = vmatpush1.bf16.msra.mxu0 0
        %562 = vmatprep.subr.bf16.mxu0 0
        %563 = vmatpush1.bf16.msra.mxu0 0
        %564 = vmatprep.subr.bf16.mxu0 0
        %565 = vmatpush1.bf16.msra.mxu0 0
        %566 = vmatprep.subr.bf16.mxu0 0
        %567 = vmatpush1.bf16.msra.mxu0 0
        %568 = vmatprep.subr.bf16.mxu0 0
        %569 = vmatpush1.bf16.msra.mxu0 0
        %570 = vmatprep.subr.bf16.mxu0 0
        %571 = vmatpush1.bf16.msra.mxu0 0
        %572 = vmatprep.subr.bf16.mxu0 0
        %573 = vmatpush1.bf16.msra.mxu0 0
        %574 = vmatprep.subr.bf16.mxu0 0
        %575 = vmatpush1.bf16.msra.mxu0 0
        %576 = vmatprep.subr.bf16.mxu0 0
        %577 = vmatpush1.bf16.msra.mxu0 0
        %578 = vmatprep.subr.bf16.mxu0 0
        %579 = vmatpush1.bf16.msra.mxu0 0
        %580 = vmatprep.subr.bf16.mxu0 0
        %581 = vmatpush1.bf16.msra.mxu0 0
        %582 = vmatprep.mubr.bf16.mxu0 0
        %583 = vmatmul.mubr.bf16.gmra.mrb[0].mxu0 %v548
        %v584 = vpop.f32.mrb[0].mxu0
        %v585 = vadd.f32 0.0, %v584
        %v586 = vpop.f32.mrb[0].mxu0
        %v587 = vpop.f32.mrb[0].mxu0
        %v588 = vadd.f32 0.0, %v587
        %v589 = vpop.f32.mrb[0].mxu0
        %590 = vdwg.mxu0
        %v591 = vadd.f32 %v461, %v585
        %v592 = vadd.f32 %v464, %v588
        %v593 = vmax.f32 %v591, 0.0
        %v594 = vmax.f32 %v592, 0.0
        %595 = vst [vmem:[%s217] sm:$0xff] %v593
        %596 = vst [vmem:[%s217 + $0x8] sm:$0xff] %v594
        %s597 = sand.u32 %s97, 1
        %s598 = scalar_lea.sflag [#allocation5], %s597
        %s599 = sand.u32 %s97, 1
        %s600 = smul.addr %s599, 16
        %s601 = scalar_lea.vmem [#allocation9], %s600
        // Predicated region
        $region45: #{tpu_custom_call.1} parent=31 // pred_check
          %p602 = pneg %p107
        $region46: #{tpu_custom_call.1} parent=31 // pred_check_branch
          %604 = sbr.rel (%p602) target = $region48
        $region47: #{tpu_custom_call.1} parent=31 // pred_region
          %s606 = ssub.s32 256, 256
          %607 = vsyncadd %s598, %s606
          %s608 = smul.addr %s21, 2
          %s609 = smul.addr %s608, 128
          %s610 = scalar_lea.hbm %s3, %s609
          %s611 = sshll.u32 %s601, 4
          %s612 = int_to_ptr.vmem [resolvable:$true] %s611
          %617 = dma.vmem_to_hbm [thread:$0]  %s612, 256, %s610, %s598, 128, 128, 8
        $region48: #{tpu_custom_call.1} parent=31 // pred_fallthru
          _
      $region32: #{tpu_custom_call.1} parent=5 // pred_fallthru
        _
      %p618 = scmp.le.s32.totalorder 2, %s16
      // Predicated region
      $region49: #{tpu_custom_call.1} parent=5 // pred_check
        %p619 = pneg %p618
      $region50: #{tpu_custom_call.1} parent=5 // pred_check_branch
        %621 = sbr.rel (%p619) target = $region52
      $region51: #{tpu_custom_call.1} parent=5 // pred_region
        %s622 = ssub.s32 %s16, 2
        // Predicated region
        $region53: #{tpu_custom_call.1} parent=51 // pred_check
          %p623 = pneg %p113
        $region54: #{tpu_custom_call.1} parent=51 // pred_check_branch
          %625 = sbr.rel (%p623) target = $region56
        $region55: #{tpu_custom_call.1} parent=51 // pred_region
          %s626 = sand.u32 %s98, 1
          %s627 = scalar_lea.sflag [#allocation5], %s626
          %s628 = sand.u32 %s98, 1
          %s629 = smul.addr %s628, 16
          %s630 = scalar_lea.vmem [#allocation9], %s629
          %631 = dma.done %s627, 256
        $region56: #{tpu_custom_call.1} parent=51 // pred_fallthru
          _
      $region52: #{tpu_custom_call.1} parent=5 // pred_fallthru
        _
    $region6: #{tpu_custom_call.1} parent=1 // loop_footer
      %s20 = sadd.s32 1, %s16
    $region7: #{tpu_custom_call.1} parent=1 // loop_footer_branch
      %15 = sbr.rel target = $region3
    $region8: #{tpu_custom_call.1} parent=1 // loop_exit
      _
    %632 = vsyncpa [#allocation4], 1
    %s633 = scalar_lea.sflag [#allocation4], 1
    %634 = vsyncpa %s633, 1
    %635 = vsyncpa [#allocation7], 1
    %636 = vsyncpa [#allocation5], 1
    %s637 = scalar_lea.sflag [#allocation5], 1
    %638 = vsyncpa %s637, 1

</llo_original>
